<compile_context>
chip_gen: v5e
topology: v5e:2x2
jax: 0.10.0
libtpu: 0.0.40
codegen_flags: <defaults>
</compile_context>

<pallas_src>
import jax
import jax.numpy as jnp
from jax import lax
from jax.experimental import pallas as pl
from jax.experimental.pallas import tpu as pltpu


# ----------------------------- Pallas kernels ------------------------------

def rnn_chunk_kernel(xw_ref, whh_ref, hout_ref, h_carry):
    """One time-chunk of the shared tanh-RNN.

    xw_ref  : [Tc, B, H] f32  -- precomputed input projection (time-major)
    whh_ref : [H, H]     bf16 -- recurrent weight (bf16 operands, f32 acc)
    hout_ref: [B, Tc, H] bf16 -- hidden states, written BATCH-major
    h_carry : [B, H]     f32  -- hidden state carried across chunks (VMEM)
    """
    c = pl.program_id(0)

    @pl.when(c == 0)
    def _():
        h_carry[...] = jnp.zeros_like(h_carry)

    whh = whh_ref[...]                       # bf16, loaded once per chunk
    Tc = xw_ref.shape[0]

    def step(t, h):
        x_t = xw_ref[t]                      # [B, H] f32 (contiguous load)
        h_new = jnp.tanh(
            x_t + jnp.dot(h.astype(jnp.bfloat16), whh,
                          preferred_element_type=jnp.float32))
        hout_ref[:, t, :] = h_new.astype(hout_ref.dtype)   # batch-major store
        return h_new

    # unroll=True -> static indices, LLO sees the whole serial chain
    h_final = lax.fori_loop(0, Tc, step, h_carry[...], unroll=True)
    h_carry[...] = h_final


def head_ce_kernel(hf_ref, wtask_ref, btask_ref, wfc_ref, bfc_ref,
                   tgt_ref, mask_ref, final_ref, part_ref, cat_scratch):
    """Fused task head + masked softmax cross-entropy over one row tile.

        final  = tanh(h_f @ W_task + b_task)
        logits = [final | h_f] @ W_fc_stacked + b_fc     (single K=2H dot)
        partial = (sum(mask * (lse - logit[tgt])), sum(mask))

    Logits never leave VMEM.  Each tile writes its own partial block, so the
    grid axis is fully parallel (v7x megacore).
    """
    hf = hf_ref[...]                                   # [TM, H] bf16
    H = hf.shape[-1]

    final = jnp.tanh(
        jnp.dot(hf, wtask_ref[...], preferred_element_type=jnp.float32)
        + btask_ref[...])                              # [TM, H] f32
    final_bf = final.astype(jnp.bfloat16)
    final_ref[...] = final_bf

    # Stage [final | h_f] as one lane-contiguous bf16 operand (K = 2H).
    cat_scratch[:, :H] = final_bf
    cat_scratch[:, H:] = hf

    logits = (jnp.dot(cat_scratch[...], wfc_ref[...],
                      preferred_element_type=jnp.float32)
              + bfc_ref[...])                          # [TM, C] f32

    m = jnp.max(logits, axis=-1, keepdims=True)
    lse = m + jnp.log(jnp.sum(jnp.exp(logits - m), axis=-1, keepdims=True))
    tgt = tgt_ref[...]                                 # [TM, 1] int32
    cls = lax.broadcasted_iota(jnp.int32, logits.shape, 1)
    tgt_logit = jnp.sum(jnp.where(cls == tgt, logits, 0.0),
                        axis=-1, keepdims=True)        # [TM, 1]
    mask = mask_ref[...]                               # [TM, 1] f32

    nll_sum = jnp.sum((lse - tgt_logit) * mask)
    cnt_sum = jnp.sum(mask)

    # Per-tile partial: lane 0 = nll_sum, lane 1 = count (rest zero).
    lane = lax.broadcasted_iota(jnp.int32, (8, 128), 1)
    part = jnp.where(lane == 0, nll_sum,
                     jnp.where(lane == 1, cnt_sum, jnp.float32(0.0)))
    part_ref[0] = part


# ------------------------------ helpers -------------------------------------

def _round_up(x, m):
    return ((x + m - 1) // m) * m


def _pick_time_chunk(T, cap=64):
    """(Tc, T_pad): chunk <= cap; pad T instead of degrading to Tc=1."""
    if T <= cap:
        return T, T                       # block == full dim (always legal)
    nc = -(-T // cap)
    Tc = _round_up(-(-T // nc), 8)        # multiple of 8 (batch-major out block)
    return Tc, Tc * nc


def _pick_row_tile(N, cap=512):
    """(TM, N_pad): row tile <= cap; pad N (mask=0 rows) instead of one huge tile."""
    if N <= cap:
        return N, N
    nt = -(-N // cap)
    TM = _round_up(-(-N // nt), 8)
    return TM, TM * nt


# ------------------------------ JAX wrapper ----------------------------------

def neural_tagger_forward(params, src_seqs, src_masks, src_feats, tgt_seqs,
                          tgt_masks, idx, concat_flag=True):
    """Mirrors Neural_Tagger.forward -> (loss, h_p, h_s)."""
    del tgt_masks  # unused by the reference forward (src_masks reaches decode)
    B, T = src_seqs.shape
    H = params["W_hh"].shape[0]

    # --- fold W_ih into the embedding tables (vocab*H tables are tiny) -------
    # xw = cat(word_emb, feat_emb) @ W_ih + b, gathered time-major.
    Pw = jnp.dot(params["E_word"], params["W_ih_w"])                    # [Vw, H]
    Pf = jnp.dot(params["E_feat"], params["W_ih_f"]) + params["b_rnn"]  # [Vf, H]
    # TODO(synk): embedding gather stays as XLA glue (jnp.take).
    xw = (jnp.take(Pw, src_seqs.T, axis=0)
          + jnp.take(Pf, src_feats.T, axis=0)).astype(jnp.float32)      # [T,B,H]

    Tc, T_pad = _pick_time_chunk(T)
    if T_pad != T:
        xw = jnp.pad(xw, ((0, T_pad - T), (0, 0), (0, 0)))

    whh = params["W_hh"].astype(jnp.bfloat16)        # bf16 operand, f32 acc

    # --- 1) ShareRNN: chunked time grid, hidden state carried in VMEM --------
    h_f = pl.pallas_call(
        rnn_chunk_kernel,
        out_shape=jax.ShapeDtypeStruct((B, T_pad, H), jnp.bfloat16),
        grid_spec=pltpu.PrefetchScalarGridSpec(
            num_scalar_prefetch=0,
            grid=(T_pad // Tc,),
            in_specs=[
                pl.BlockSpec((Tc, B, H), lambda c: (c, 0, 0)),
                pl.BlockSpec((H, H), lambda c: (0, 0)),
            ],
            out_specs=pl.BlockSpec((B, Tc, H), lambda c: (0, c, 0)),
            scratch_shapes=[pltpu.VMEM((B, H), jnp.float32)],
        ),
        # hidden-state carry requires a sequential time axis
        compiler_params=pltpu.CompilerParams(
            dimension_semantics=("arbitrary",),
            vmem_limit_bytes=32 * 1024 * 1024),
    )(xw, whh)

    if T_pad != T:
        h_f = h_f[:, :T, :]                          # drop padded timesteps

    # --- 2+3) fused task head + masked cross-entropy (parallel row tiles) ----
    N = B * T
    hf_flat = h_f.reshape(N, H)                      # batch-major: free reshape
    tgt_flat = tgt_seqs.reshape(N, 1).astype(jnp.int32)
    mask_flat = src_masks.reshape(N, 1).astype(jnp.float32)

    TM, N_pad = _pick_row_tile(N)
    if N_pad != N:
        pad = N_pad - N
        hf_flat = jnp.pad(hf_flat, ((0, pad), (0, 0)))
        tgt_flat = jnp.pad(tgt_flat, ((0, pad), (0, 0)))
        mask_flat = jnp.pad(mask_flat, ((0, pad), (0, 0)))  # mask=0 rows

    W_task = params["W_task"][idx].astype(jnp.bfloat16)     # [H, H]
    b_task = params["b_task"][idx]                           # [1, H] f32
    if concat_flag:
        W_fc = params["W_fc_cat"][idx].astype(jnp.bfloat16)  # [2H, C]
    else:
        W = params["W_fc_add"][idx].astype(jnp.bfloat16)     # [H, C]
        W_fc = jnp.concatenate([W, W], axis=0)               # (a+b)@W == cat@[[W],[W]]
    b_fc = params["b_fc"][idx]                               # [1, C] f32
    C = b_fc.shape[-1]

    nt = N_pad // TM
    final_flat, partials = pl.pallas_call(
        head_ce_kernel,
        out_shape=(jax.ShapeDtypeStruct((N_pad, H), jnp.bfloat16),
                   jax.ShapeDtypeStruct((nt, 8, 128), jnp.float32)),
        grid_spec=pltpu.PrefetchScalarGridSpec(
            num_scalar_prefetch=0,
            grid=(nt,),
            in_specs=[
                pl.BlockSpec((TM, H), lambda r: (r, 0)),
                pl.BlockSpec((H, H), lambda r: (0, 0)),
                pl.BlockSpec((1, H), lambda r: (0, 0)),
                pl.BlockSpec((2 * H, C), lambda r: (0, 0)),
                pl.BlockSpec((1, C), lambda r: (0, 0)),
                pl.BlockSpec((TM, 1), lambda r: (r, 0)),
                pl.BlockSpec((TM, 1), lambda r: (r, 0)),
            ],
            out_specs=(pl.BlockSpec((TM, H), lambda r: (r, 0)),
                       pl.BlockSpec((1, 8, 128), lambda r: (r, 0, 0))),
            scratch_shapes=[pltpu.VMEM((TM, 2 * H), jnp.bfloat16)],
        ),
        # per-tile partials -> no cross-tile state -> megacore-parallel
        compiler_params=pltpu.CompilerParams(
            dimension_semantics=("parallel",),
            vmem_limit_bytes=32 * 1024 * 1024),
    )(hf_flat, W_task, b_task, W_fc, b_fc, tgt_flat, mask_flat)

    nll_total = jnp.sum(partials[:, 0, 0])
    cnt_total = jnp.sum(partials[:, 0, 1])
    loss = nll_total / jnp.maximum(cnt_total, jnp.float32(1.0))

    # h_p = final_list[idx] (detached), h_s = h_f (detached), batch-major.
    h_p = jax.lax.stop_gradient(final_flat[:N].reshape(B, T, H))
    h_s = jax.lax.stop_gradient(h_f)
    return loss, h_p, h_s


# ------------------------------ param init -----------------------------------

def init_params(key, vocab=100, feat_vocab=20, word_dim=64, feat_dim=64,
                hidden=128, num_tags=128, num_tasks=2):
    ks = jax.random.split(key, 10)
    s = 0.1
    return {
        "E_word": s * jax.random.normal(ks[0], (vocab, word_dim), jnp.float32),
        "E_feat": s * jax.random.normal(ks[1], (feat_vocab, feat_dim), jnp.float32),
        # W_ih split into word/feature halves (== cat(word,feat) @ W_ih)
        "W_ih_w": s * jax.random.normal(ks[2], (word_dim, hidden), jnp.float32),
        "W_ih_f": s * jax.random.normal(ks[7], (feat_dim, hidden), jnp.float32),
        "W_hh": s * jax.random.normal(ks[3], (hidden, hidden), jnp.float32),
        "b_rnn": jnp.zeros((1, hidden), jnp.float32),
        "W_task": s * jax.random.normal(ks[4], (num_tasks, hidden, hidden), jnp.float32),
        "b_task": jnp.zeros((num_tasks, 1, hidden), jnp.float32),
        "W_fc_cat": s * jax.random.normal(ks[5], (num_tasks, 2 * hidden, num_tags), jnp.float32),
        "W_fc_add": s * jax.random.normal(ks[6], (num_tasks, hidden, num_tags), jnp.float32),
        "b_fc": jnp.zeros((num_tasks, 1, num_tags), jnp.float32),
    }


# --------------------------------- main ---------------------------------------

if __name__ == "__main__":
    key = jax.random.PRNGKey(0)
    B, T = 8, 8
    vocab, feat_vocab, num_tags = 100, 20, 128

    params = init_params(key, vocab=vocab, feat_vocab=feat_vocab,
                         num_tags=num_tags)

    k1, k2, k3 = jax.random.split(jax.random.PRNGKey(0), 3)
    src_seqs = jax.random.randint(k1, (B, T), 0, vocab, dtype=jnp.int32)
    src_feats = jax.random.randint(k2, (B, T), 0, feat_vocab, dtype=jnp.int32)
    tgt_seqs = jax.random.randint(k3, (B, T), 0, num_tags, dtype=jnp.int32)
    # mask out the last 2 positions of every sequence (padding)
    src_masks = jnp.concatenate(
        [jnp.ones((B, T - 2), jnp.float32), jnp.zeros((B, 2), jnp.float32)], axis=1)
    tgt_masks = src_masks
    idx = 1  # task index

    loss, h_p, h_s = neural_tagger_forward(
        params, src_seqs, src_masks, src_feats, tgt_seqs, tgt_masks, idx,
        concat_flag=True)
    jax.block_until_ready((loss, h_p, h_s))

    assert loss.shape == ()
    assert h_p.shape == (B, T, 128) and h_s.shape == (B, T, 128)
    print("KERNEL_OK")
</pallas_src>

<mosaic_0001>
module attributes {stable_mosaic.version = 11 : i64} {
  func.func @rnn_chunk_kernel(%arg0: i32, %arg1: memref<8x8x128xf32, #tpu.memory_space<vmem>>, %arg2: memref<128x128xbf16, #tpu.memory_space<vmem>>, %arg3: memref<8x8x128xbf16, #tpu.memory_space<vmem>>, %arg4: memref<8x128xf32, #tpu.memory_space<vmem>>) attributes {dimension_semantics = [#tpu.dimension_semantics<arbitrary>], iteration_bounds = array<i64: 1>, scalar_prefetch = 0 : i64, scratch_operands = 1 : i64, tpu.core_type = #tpu.core_type<tc>, window_params = [{transform_indices = @transform_0, window_bounds = array<i64: 8, 8, 128>}, {pipeline_mode = #tpu.pipeline_mode<synchronous>, transform_indices = @transform_1, window_bounds = array<i64: 128, 128>}, {transform_indices = @transform_2, window_bounds = array<i64: 8, 8, 128>}]} {
    %c0_i32 = arith.constant 0 : i32
    %0 = arith.cmpi eq, %arg0, %c0_i32 : i32
    %1 = arith.extui %0 : i1 to i32
    %c0_i32_0 = arith.constant 0 : i32
    %2 = arith.cmpi ne, %1, %c0_i32_0 : i32
    scf.if %2 {
      %cst_46 = arith.constant 0.000000e+00 : f32
      %102 = vector.broadcast %cst_46 : f32 to vector<8x128xf32>
      %c0_47 = arith.constant 0 : index
      %c0_48 = arith.constant 0 : index
      %103 = vector.load %arg4[%c0_47, %c0_48] : memref<8x128xf32, #tpu.memory_space<vmem>>, vector<8x128xf32>
      tpu.vector_store %arg4[%c0_47, %c0_48], %102 {strides = array<i32>} : memref<8x128xf32, #tpu.memory_space<vmem>>, vector<8x128xf32>,
    } else {
    }
    %c0 = arith.constant 0 : index
    %c0_1 = arith.constant 0 : index
    %3 = vector.load %arg2[%c0, %c0_1] : memref<128x128xbf16, #tpu.memory_space<vmem>>, vector<128x128xbf16>
    %c0_2 = arith.constant 0 : index
    %c0_3 = arith.constant 0 : index
    %4 = vector.load %arg4[%c0_2, %c0_3] : memref<8x128xf32, #tpu.memory_space<vmem>>, vector<8x128xf32>
    %c0_i32_4 = arith.constant 0 : i32
    %5 = arith.index_cast %c0_i32_4 : i32 to index
    %c0_5 = arith.constant 0 : index
    %c0_6 = arith.constant 0 : index
    %6 = vector.load %arg1[%5, %c0_5, %c0_6] : memref<8x8x128xf32, #tpu.memory_space<vmem>>, vector<1x8x128xf32>
    %7 = vector.shape_cast %6 : vector<1x8x128xf32> to vector<8x128xf32>
    %8 = arith.truncf %4 : vector<8x128xf32> to vector<8x128xbf16>
    %cst = arith.constant dense<0.000000e+00> : vector<8x128xf32>
    %9 = tpu.matmul %8, %3, %cst {dimension_numbers = #tpu.dot_dimension_numbers<[1], [0], [0], [1], [0, 0, 1, 1], [], []>} : vector<8x128xbf16>, vector<128x128xbf16>, vector<8x128xf32> -> vector<8x128xf32>
    %10 = arith.addf %7, %9 : vector<8x128xf32>
    %11 = math.tanh %10 : vector<8x128xf32>
    %12 = arith.truncf %11 : vector<8x128xf32> to vector<8x128xbf16>
    %c0_7 = arith.constant 0 : index
    %13 = arith.index_cast %c0_i32_4 : i32 to index
    %c0_8 = arith.constant 0 : index
    %14 = vector.load %arg3[%c0_7, %13, %c0_8] : memref<8x8x128xbf16, #tpu.memory_space<vmem>>, vector<8x1x128xbf16>
    %15 = vector.shape_cast %14 : vector<8x1x128xbf16> to vector<8x128xbf16>
    %16 = vector.shape_cast %12 : vector<8x128xbf16> to vector<8x1x128xbf16>
    tpu.vector_store %arg3[%c0_7, %13, %c0_8], %16 {strides = array<i32>} : memref<8x8x128xbf16, #tpu.memory_space<vmem>>, vector<8x1x128xbf16>,
    %c1_i32 = arith.constant 1 : i32
    %17 = arith.index_cast %c1_i32 : i32 to index
    %c0_9 = arith.constant 0 : index
    %c0_10 = arith.constant 0 : index
    %18 = vector.load %arg1[%17, %c0_9, %c0_10] : memref<8x8x128xf32, #tpu.memory_space<vmem>>, vector<1x8x128xf32>
    %19 = vector.shape_cast %18 : vector<1x8x128xf32> to vector<8x128xf32>
    %20 = arith.truncf %11 : vector<8x128xf32> to vector<8x128xbf16>
    %cst_11 = arith.constant dense<0.000000e+00> : vector<8x128xf32>
    %21 = tpu.matmul %20, %3, %cst_11 {dimension_numbers = #tpu.dot_dimension_numbers<[1], [0], [0], [1], [0, 0, 1, 1], [], []>} : vector<8x128xbf16>, vector<128x128xbf16>, vector<8x128xf32> -> vector<8x128xf32>
    %22 = arith.addf %19, %21 : vector<8x128xf32>
    %23 = math.tanh %22 : vector<8x128xf32>
    %24 = arith.truncf %23 : vector<8x128xf32> to vector<8x128xbf16>
    %c0_12 = arith.constant 0 : index
    %25 = arith.index_cast %c1_i32 : i32 to index
    %c0_13 = arith.constant 0 : index
    %26 = vector.load %arg3[%c0_12, %25, %c0_13] : memref<8x8x128xbf16, #tpu.memory_space<vmem>>, vector<8x1x128xbf16>
    %27 = vector.shape_cast %26 : vector<8x1x128xbf16> to vector<8x128xbf16>
    %28 = vector.shape_cast %24 : vector<8x128xbf16> to vector<8x1x128xbf16>
    tpu.vector_store %arg3[%c0_12, %25, %c0_13], %28 {strides = array<i32>} : memref<8x8x128xbf16, #tpu.memory_space<vmem>>, vector<8x1x128xbf16>,
    %c2_i32 = arith.constant 2 : i32
    %29 = arith.index_cast %c2_i32 : i32 to index
    %c0_14 = arith.constant 0 : index
    %c0_15 = arith.constant 0 : index
    %30 = vector.load %arg1[%29, %c0_14, %c0_15] : memref<8x8x128xf32, #tpu.memory_space<vmem>>, vector<1x8x128xf32>
    %31 = vector.shape_cast %30 : vector<1x8x128xf32> to vector<8x128xf32>
    %32 = arith.truncf %23 : vector<8x128xf32> to vector<8x128xbf16>
    %cst_16 = arith.constant dense<0.000000e+00> : vector<8x128xf32>
    %33 = tpu.matmul %32, %3, %cst_16 {dimension_numbers = #tpu.dot_dimension_numbers<[1], [0], [0], [1], [0, 0, 1, 1], [], []>} : vector<8x128xbf16>, vector<128x128xbf16>, vector<8x128xf32> -> vector<8x128xf32>
    %34 = arith.addf %31, %33 : vector<8x128xf32>
    %35 = math.tanh %34 : vector<8x128xf32>
    %36 = arith.truncf %35 : vector<8x128xf32> to vector<8x128xbf16>
    %c0_17 = arith.constant 0 : index
    %37 = arith.index_cast %c2_i32 : i32 to index
    %c0_18 = arith.constant 0 : index
    %38 = vector.load %arg3[%c0_17, %37, %c0_18] : memref<8x8x128xbf16, #tpu.memory_space<vmem>>, vector<8x1x128xbf16>
    %39 = vector.shape_cast %38 : vector<8x1x128xbf16> to vector<8x128xbf16>
    %40 = vector.shape_cast %36 : vector<8x128xbf16> to vector<8x1x128xbf16>
    tpu.vector_store %arg3[%c0_17, %37, %c0_18], %40 {strides = array<i32>} : memref<8x8x128xbf16, #tpu.memory_space<vmem>>, vector<8x1x128xbf16>,
    %c3_i32 = arith.constant 3 : i32
    %41 = arith.index_cast %c3_i32 : i32 to index
    %c0_19 = arith.constant 0 : index
    %c0_20 = arith.constant 0 : index
    %42 = vector.load %arg1[%41, %c0_19, %c0_20] : memref<8x8x128xf32, #tpu.memory_space<vmem>>, vector<1x8x128xf32>
    %43 = vector.shape_cast %42 : vector<1x8x128xf32> to vector<8x128xf32>
    %44 = arith.truncf %35 : vector<8x128xf32> to vector<8x128xbf16>
    %cst_21 = arith.constant dense<0.000000e+00> : vector<8x128xf32>
    %45 = tpu.matmul %44, %3, %cst_21 {dimension_numbers = #tpu.dot_dimension_numbers<[1], [0], [0], [1], [0, 0, 1, 1], [], []>} : vector<8x128xbf16>, vector<128x128xbf16>, vector<8x128xf32> -> vector<8x128xf32>
    %46 = arith.addf %43, %45 : vector<8x128xf32>
    %47 = math.tanh %46 : vector<8x128xf32>
    %48 = arith.truncf %47 : vector<8x128xf32> to vector<8x128xbf16>
    %c0_22 = arith.constant 0 : index
    %49 = arith.index_cast %c3_i32 : i32 to index
    %c0_23 = arith.constant 0 : index
    %50 = vector.load %arg3[%c0_22, %49, %c0_23] : memref<8x8x128xbf16, #tpu.memory_space<vmem>>, vector<8x1x128xbf16>
    %51 = vector.shape_cast %50 : vector<8x1x128xbf16> to vector<8x128xbf16>
    %52 = vector.shape_cast %48 : vector<8x128xbf16> to vector<8x1x128xbf16>
    tpu.vector_store %arg3[%c0_22, %49, %c0_23], %52 {strides = array<i32>} : memref<8x8x128xbf16, #tpu.memory_space<vmem>>, vector<8x1x128xbf16>,
    %c4_i32 = arith.constant 4 : i32
    %53 = arith.index_cast %c4_i32 : i32 to index
    %c0_24 = arith.constant 0 : index
    %c0_25 = arith.constant 0 : index
    %54 = vector.load %arg1[%53, %c0_24, %c0_25] : memref<8x8x128xf32, #tpu.memory_space<vmem>>, vector<1x8x128xf32>
    %55 = vector.shape_cast %54 : vector<1x8x128xf32> to vector<8x128xf32>
    %56 = arith.truncf %47 : vector<8x128xf32> to vector<8x128xbf16>
    %cst_26 = arith.constant dense<0.000000e+00> : vector<8x128xf32>
    %57 = tpu.matmul %56, %3, %cst_26 {dimension_numbers = #tpu.dot_dimension_numbers<[1], [0], [0], [1], [0, 0, 1, 1], [], []>} : vector<8x128xbf16>, vector<128x128xbf16>, vector<8x128xf32> -> vector<8x128xf32>
    %58 = arith.addf %55, %57 : vector<8x128xf32>
    %59 = math.tanh %58 : vector<8x128xf32>
    %60 = arith.truncf %59 : vector<8x128xf32> to vector<8x128xbf16>
    %c0_27 = arith.constant 0 : index
    %61 = arith.index_cast %c4_i32 : i32 to index
    %c0_28 = arith.constant 0 : index
    %62 = vector.load %arg3[%c0_27, %61, %c0_28] : memref<8x8x128xbf16, #tpu.memory_space<vmem>>, vector<8x1x128xbf16>
    %63 = vector.shape_cast %62 : vector<8x1x128xbf16> to vector<8x128xbf16>
    %64 = vector.shape_cast %60 : vector<8x128xbf16> to vector<8x1x128xbf16>
    tpu.vector_store %arg3[%c0_27, %61, %c0_28], %64 {strides = array<i32>} : memref<8x8x128xbf16, #tpu.memory_space<vmem>>, vector<8x1x128xbf16>,
    %c5_i32 = arith.constant 5 : i32
    %65 = arith.index_cast %c5_i32 : i32 to index
    %c0_29 = arith.constant 0 : index
    %c0_30 = arith.constant 0 : index
    %66 = vector.load %arg1[%65, %c0_29, %c0_30] : memref<8x8x128xf32, #tpu.memory_space<vmem>>, vector<1x8x128xf32>
    %67 = vector.shape_cast %66 : vector<1x8x128xf32> to vector<8x128xf32>
    %68 = arith.truncf %59 : vector<8x128xf32> to vector<8x128xbf16>
    %cst_31 = arith.constant dense<0.000000e+00> : vector<8x128xf32>
    %69 = tpu.matmul %68, %3, %cst_31 {dimension_numbers = #tpu.dot_dimension_numbers<[1], [0], [0], [1], [0, 0, 1, 1], [], []>} : vector<8x128xbf16>, vector<128x128xbf16>, vector<8x128xf32> -> vector<8x128xf32>
    %70 = arith.addf %67, %69 : vector<8x128xf32>
    %71 = math.tanh %70 : vector<8x128xf32>
    %72 = arith.truncf %71 : vector<8x128xf32> to vector<8x128xbf16>
    %c0_32 = arith.constant 0 : index
    %73 = arith.index_cast %c5_i32 : i32 to index
    %c0_33 = arith.constant 0 : index
    %74 = vector.load %arg3[%c0_32, %73, %c0_33] : memref<8x8x128xbf16, #tpu.memory_space<vmem>>, vector<8x1x128xbf16>
    %75 = vector.shape_cast %74 : vector<8x1x128xbf16> to vector<8x128xbf16>
    %76 = vector.shape_cast %72 : vector<8x128xbf16> to vector<8x1x128xbf16>
    tpu.vector_store %arg3[%c0_32, %73, %c0_33], %76 {strides = array<i32>} : memref<8x8x128xbf16, #tpu.memory_space<vmem>>, vector<8x1x128xbf16>,
    %c6_i32 = arith.constant 6 : i32
    %77 = arith.index_cast %c6_i32 : i32 to index
    %c0_34 = arith.constant 0 : index
    %c0_35 = arith.constant 0 : index
    %78 = vector.load %arg1[%77, %c0_34, %c0_35] : memref<8x8x128xf32, #tpu.memory_space<vmem>>, vector<1x8x128xf32>
    %79 = vector.shape_cast %78 : vector<1x8x128xf32> to vector<8x128xf32>
    %80 = arith.truncf %71 : vector<8x128xf32> to vector<8x128xbf16>
    %cst_36 = arith.constant dense<0.000000e+00> : vector<8x128xf32>
    %81 = tpu.matmul %80, %3, %cst_36 {dimension_numbers = #tpu.dot_dimension_numbers<[1], [0], [0], [1], [0, 0, 1, 1], [], []>} : vector<8x128xbf16>, vector<128x128xbf16>, vector<8x128xf32> -> vector<8x128xf32>
    %82 = arith.addf %79, %81 : vector<8x128xf32>
    %83 = math.tanh %82 : vector<8x128xf32>
    %84 = arith.truncf %83 : vector<8x128xf32> to vector<8x128xbf16>
    %c0_37 = arith.constant 0 : index
    %85 = arith.index_cast %c6_i32 : i32 to index
    %c0_38 = arith.constant 0 : index
    %86 = vector.load %arg3[%c0_37, %85, %c0_38] : memref<8x8x128xbf16, #tpu.memory_space<vmem>>, vector<8x1x128xbf16>
    %87 = vector.shape_cast %86 : vector<8x1x128xbf16> to vector<8x128xbf16>
    %88 = vector.shape_cast %84 : vector<8x128xbf16> to vector<8x1x128xbf16>
    tpu.vector_store %arg3[%c0_37, %85, %c0_38], %88 {strides = array<i32>} : memref<8x8x128xbf16, #tpu.memory_space<vmem>>, vector<8x1x128xbf16>,
    %c7_i32 = arith.constant 7 : i32
    %89 = arith.index_cast %c7_i32 : i32 to index
    %c0_39 = arith.constant 0 : index
    %c0_40 = arith.constant 0 : index
    %90 = vector.load %arg1[%89, %c0_39, %c0_40] : memref<8x8x128xf32, #tpu.memory_space<vmem>>, vector<1x8x128xf32>
    %91 = vector.shape_cast %90 : vector<1x8x128xf32> to vector<8x128xf32>
    %92 = arith.truncf %83 : vector<8x128xf32> to vector<8x128xbf16>
    %cst_41 = arith.constant dense<0.000000e+00> : vector<8x128xf32>
    %93 = tpu.matmul %92, %3, %cst_41 {dimension_numbers = #tpu.dot_dimension_numbers<[1], [0], [0], [1], [0, 0, 1, 1], [], []>} : vector<8x128xbf16>, vector<128x128xbf16>, vector<8x128xf32> -> vector<8x128xf32>
    %94 = arith.addf %91, %93 : vector<8x128xf32>
    %95 = math.tanh %94 : vector<8x128xf32>
    %96 = arith.truncf %95 : vector<8x128xf32> to vector<8x128xbf16>
    %c0_42 = arith.constant 0 : index
    %97 = arith.index_cast %c7_i32 : i32 to index
    %c0_43 = arith.constant 0 : index
    %98 = vector.load %arg3[%c0_42, %97, %c0_43] : memref<8x8x128xbf16, #tpu.memory_space<vmem>>, vector<8x1x128xbf16>
    %99 = vector.shape_cast %98 : vector<8x1x128xbf16> to vector<8x128xbf16>
    %100 = vector.shape_cast %96 : vector<8x128xbf16> to vector<8x1x128xbf16>
    tpu.vector_store %arg3[%c0_42, %97, %c0_43], %100 {strides = array<i32>} : memref<8x8x128xbf16, #tpu.memory_space<vmem>>, vector<8x1x128xbf16>,
    %c8_i32 = arith.constant 8 : i32
    %c0_44 = arith.constant 0 : index
    %c0_45 = arith.constant 0 : index
    %101 = vector.load %arg4[%c0_44, %c0_45] : memref<8x128xf32, #tpu.memory_space<vmem>>, vector<8x128xf32>
    tpu.vector_store %arg4[%c0_44, %c0_45], %95 {strides = array<i32>} : memref<8x128xf32, #tpu.memory_space<vmem>>, vector<8x128xf32>,
    return
  }
  func.func @transform_0(%arg0: i32) -> (i32, i32, i32) {
    %c0_i32 = arith.constant 0 : i32
    %c0_i32_0 = arith.constant 0 : i32
    %c0_i32_1 = arith.constant 0 : i32
    return %arg0, %c0_i32, %c0_i32_0 : i32, i32, i32
  }
  func.func @transform_1(%arg0: i32) -> (i32, i32) {
    %c0_i32 = arith.constant 0 : i32
    %c0_i32_0 = arith.constant 0 : i32
    %c0_i32_1 = arith.constant 0 : i32
    return %c0_i32, %c0_i32_0 : i32, i32
  }
  func.func @transform_2(%arg0: i32) -> (i32, i32, i32) {
    %c0_i32 = arith.constant 0 : i32
    %c0_i32_0 = arith.constant 0 : i32
    %c0_i32_1 = arith.constant 0 : i32
    return %c0_i32, %arg0, %c0_i32_0 : i32, i32, i32
  }
}

</mosaic_0001>

<llo_original>
// kernel: tpu_custom_call.1
$region0: #{tpu_custom_call.1}
  #allocation0 [shape = 'u32[]', space=smem, size = 0x4, offset = 0x4, fixed_abs, tag = 'smem constant byte address 0x4 - core index']
  #allocation1 [shape = 'u32[72,128]{1,0:T(1,128)}', space=vmem, size = 0x9000, scoped, tag = 'internal scratch']
  #allocation2 [shape = 'f32[8,128]{1,0:T(8,128)}', space=vmem, size = 0x1000, scoped, tag = 'scratch operand']
  %s0 = inlined_call_operand.hbm [shape: f32[8,8,128], index: 0, kind: input, shape index: {}]
  %s1 = inlined_call_operand.hbm [shape: bf16[128,128], index: 1, kind: input, shape index: {}]
  %s2 = inlined_call_operand.hbm [shape: bf16[8,8,128], index: 2, kind: output, shape index: {}]
  %s3 = sld [smem:[#allocation0]]
  $region30: #{tpu_custom_call.1} parent=0
    _
  %s5 = ssub.s32 1, %s3
  %s6 = scalar_select 0, %s5, %s3
  $region1: #{tpu_custom_call.1} parent=0
    #allocation3 [shape = 'u8[32768]{0}', space=vmem, size = 0x8000, scoped, tag = 'input window, operand 0, single buffered']
    #allocation4 [shape = 's32[1]{0}', space=sflag, size = 0x4, scoped, tag = 'scoped memory for tpu_custom_call.1']
    #allocation5 [shape = 's32[1]{0}', space=sflag, size = 0x4, scoped, tag = 'scoped memory for tpu_custom_call.1']
    #allocation6 [shape = 'u8[32768]{0}', space=vmem, size = 0x8000, scoped, tag = 'input window, operand 1, single buffered']
    #allocation7 [shape = 's32[1]{0}', space=sflag, size = 0x4, scoped, tag = 'scoped memory for tpu_custom_call.1']
    #allocation8 [shape = 'u8[16384]{0}', space=vmem, size = 0x4000, scoped, tag = 'output window, operand 0, single buffered']
    %7 = vsyncpa [#allocation4], 0
    %8 = vsyncpa [#allocation7], 0
    %9 = vsyncpa [#allocation5], 0
    // Predicated region
    $region2: #{tpu_custom_call.1} parent=1 // pred_check
      _
    $region3: #{tpu_custom_call.1} parent=1 // pred_check_branch
      %11 = sbr.rel (0) target = $region5
    $region4: #{tpu_custom_call.1} parent=1 // pred_region
      %13 = vsyncadd [#allocation4], 0
      %s14 = sshll.u32 %s0, 4
      %s15 = int_to_ptr.hbm [resolvable:$true] %s14
      %s16 = sshll.u32 [#allocation3], 4
      %s17 = int_to_ptr.vmem [resolvable:$true] %s16
      %22 = dma.hbm_to_vmem [thread:$0]  %s15, 1024, %s17, [#allocation4], 128, 128, 8
    $region5: #{tpu_custom_call.1} parent=1 // pred_fallthru
      _
    // Predicated region
    $region6: #{tpu_custom_call.1} parent=1 // pred_check
      _
    $region7: #{tpu_custom_call.1} parent=1 // pred_check_branch
      %24 = sbr.rel (0) target = $region9
    $region8: #{tpu_custom_call.1} parent=1 // pred_region
      %26 = vsyncadd [#allocation7], 0
      %s27 = sshll.u32 %s1, 4
      %s28 = int_to_ptr.hbm [resolvable:$true] %s27
      %s29 = sshll.u32 [#allocation6], 4
      %s30 = int_to_ptr.vmem [resolvable:$true] %s29
      %35 = dma.hbm_to_vmem [thread:$0]  %s28, 1024, %s30, [#allocation7], 64, 64, 4
    $region9: #{tpu_custom_call.1} parent=1 // pred_fallthru
      _
    // Predicated region
    $region10: #{tpu_custom_call.1} parent=1 // pred_check
      _
    $region11: #{tpu_custom_call.1} parent=1 // pred_check_branch
      %37 = sbr.rel (0) target = $region13
    $region12: #{tpu_custom_call.1} parent=1 // pred_region
      %39 = dma.done [#allocation4], 1024
    $region13: #{tpu_custom_call.1} parent=1 // pred_fallthru
      _
    // Predicated region
    $region14: #{tpu_custom_call.1} parent=1 // pred_check
      _
    $region15: #{tpu_custom_call.1} parent=1 // pred_check_branch
      %41 = sbr.rel (0) target = $region17
    $region16: #{tpu_custom_call.1} parent=1 // pred_region
      %43 = dma.done [#allocation7], 1024
    $region17: #{tpu_custom_call.1} parent=1 // pred_fallthru
      _
    %p44 = scmp.eq.s32.totalorder 0, 0
    // Predicated region
    $region18: #{tpu_custom_call.1} parent=1 // pred_check
      %p45 = pneg %p44
    $region19: #{tpu_custom_call.1} parent=1 // pred_check_branch
      %47 = sbr.rel (%p45) target = $region21
    $region20: #{tpu_custom_call.1} parent=1 // pred_region
      %48 = vst [vmem:[#allocation2] sm:$0xff] 0.0
    $region21: #{tpu_custom_call.1} parent=1 // pred_fallthru
      _
    %v49 = vld [vmem:[#allocation6] sm:$0xf]
    %v50 = vld [vmem:[#allocation6 + $0x4] sm:$0xf]
    %v51 = vld [vmem:[#allocation6 + $0x8] sm:$0xf]
    %v52 = vld [vmem:[#allocation6 + $0xc] sm:$0xf]
    %v53 = vld [vmem:[#allocation6 + $0x10] sm:$0xf]
    %v54 = vld [vmem:[#allocation6 + $0x14] sm:$0xf]
    %v55 = vld [vmem:[#allocation6 + $0x18] sm:$0xf]
    %v56 = vld [vmem:[#allocation6 + $0x1c] sm:$0xf]
    %v57 = vld [vmem:[#allocation6 + $0x20] sm:$0xf]
    %v58 = vld [vmem:[#allocation6 + $0x24] sm:$0xf]
    %v59 = vld [vmem:[#allocation6 + $0x28] sm:$0xf]
    %v60 = vld [vmem:[#allocation6 + $0x2c] sm:$0xf]
    %v61 = vld [vmem:[#allocation6 + $0x30] sm:$0xf]
    %v62 = vld [vmem:[#allocation6 + $0x34] sm:$0xf]
    %v63 = vld [vmem:[#allocation6 + $0x38] sm:$0xf]
    %v64 = vld [vmem:[#allocation6 + $0x3c] sm:$0xf]
    %v65 = vld [vmem:[#allocation2] sm:$0xff]
    %v66 = vld [vmem:[#allocation3] sm:$0xff]
    %v67 = vpack.c.bf16 %v65, %v65
    %v84 = vunpack.c.l.b16 %v49
    %v85 = vunpack.c.l.b16 %v50
    %v86 = vunpack.c.l.b16 %v51
    %v87 = vunpack.c.l.b16 %v52
    %v88 = vunpack.c.l.b16 %v53
    %v89 = vunpack.c.l.b16 %v54
    %v90 = vunpack.c.l.b16 %v55
    %v91 = vunpack.c.l.b16 %v56
    %v92 = vunpack.c.l.b16 %v57
    %v93 = vunpack.c.l.b16 %v58
    %v94 = vunpack.c.l.b16 %v59
    %v95 = vunpack.c.l.b16 %v60
    %v96 = vunpack.c.l.b16 %v61
    %v97 = vunpack.c.l.b16 %v62
    %v98 = vunpack.c.l.b16 %v63
    %v99 = vunpack.c.l.b16 %v64
    %v100 = vpack.c.b16 %v85, %v84
    %v101 = vpack.c.b16 %v87, %v86
    %v102 = vpack.c.b16 %v89, %v88
    %v103 = vpack.c.b16 %v91, %v90
    %v104 = vpack.c.b16 %v93, %v92
    %v105 = vpack.c.b16 %v95, %v94
    %v106 = vpack.c.b16 %v97, %v96
    %v107 = vpack.c.b16 %v99, %v98
    %116 = vmatpush.bf16.msra.mxu0 %v107
    %117 = vmatpush.bf16.msra.mxu0 %v106
    %118 = vmatpush.bf16.msra.mxu0 %v105
    %119 = vmatpush.bf16.msra.mxu0 %v104
    %120 = vmatpush.bf16.msra.mxu0 %v103
    %121 = vmatpush.bf16.msra.mxu0 %v102
    %122 = vmatpush.bf16.msra.mxu0 %v101
    %123 = vmatpush.bf16.msra.mxu0 %v100
    %124 = vmatmul.bf16.gmra.mxu0 %v67
    %v125 = vpop.f32.mrf.mxu0
    %v126 = vadd.f32 0.0, %v125
    %v127 = vpop.f32.mrf.mxu0
    %128 = vdwg.mxu0
    %v129 = vadd.f32 %v66, %v126
    %v130 = vtanh.pop %v129
    %v131 = vpack.c.bf16 %v130, %v130
    %v133 = vrot.slane %v131, 3
    %vm134 = vcmask 1040384
    %v137 = vsel %vm134, %v131, %v133
    %vm139 = vcmask 1041409
    %v140 = vsel %vm139, %v131, %v133
    %v142 = vrot.slane %v140, 1
    %vm143 = vcmask 1042434
    %v144 = vsel %vm143, %v131, %v133
    %v146 = vrot.slane %v144, 2
    %vm147 = vcmask 1043459
    %v148 = vsel %vm147, %v131, %v133
    %v150 = vrot.slane %v148, 3
    %v151 = vunpack.i.l.s16 %v137
    %v152 = vunpack.i.h.s16 %v137
    %v153 = vunpack.i.l.s16 %v142
    %v154 = vunpack.i.h.s16 %v142
    %v155 = vunpack.i.l.s16 %v146
    %v156 = vunpack.i.h.s16 %v146
    %v157 = vunpack.i.l.s16 %v150
    %v158 = vunpack.i.h.s16 %v150
    %v159 = vpack.i.b16 %v151, %v151
    %v160 = vpack.i.b16 %v152, %v152
    %v161 = vpack.i.b16 %v153, %v153
    %v162 = vpack.i.b16 %v154, %v154
    %v163 = vpack.i.b16 %v155, %v155
    %v164 = vpack.i.b16 %v156, %v156
    %v165 = vpack.i.b16 %v157, %v157
    %v166 = vpack.i.b16 %v158, %v158
    %v168 = vunpack.c.l.s4 286326784
    %v169 = vunpack.c.0.s8 %v168
    %v170 = vperm.slane %v159, %v169
    %v172 = vunpack.c.l.s4 286326784
    %v173 = vunpack.c.0.s8 %v172
    %v174 = vperm.slane %v160, %v173
    %v176 = vunpack.c.l.s4 286326784
    %v177 = vunpack.c.0.s8 %v176
    %v178 = vperm.slane %v161, %v177
    %v180 = vunpack.c.l.s4 286326784
    %v181 = vunpack.c.0.s8 %v180
    %v182 = vperm.slane %v162, %v181
    %v184 = vunpack.c.l.s4 286326784
    %v185 = vunpack.c.0.s8 %v184
    %v186 = vperm.slane %v163, %v185
    %v188 = vunpack.c.l.s4 286326784
    %v189 = vunpack.c.0.s8 %v188
    %v190 = vperm.slane %v164, %v189
    %v192 = vunpack.c.l.s4 286326784
    %v193 = vunpack.c.0.s8 %v192
    %v194 = vperm.slane %v165, %v193
    %v196 = vunpack.c.l.s4 286326784
    %v197 = vunpack.c.0.s8 %v196
    %v198 = vperm.slane %v166, %v197
    %vm207 = vcmask 1040384
    %vm208 = vsmask.f32 256
    %vm209 = vmand %vm207, %vm208
    %v210 = vld [vmem:[#allocation8] sm:$0x1]
    %v211 = vsel %vm209, %v170, %v210
    %212 = vst [vmem:[#allocation8] sm:$0x1] %v211
    %v213 = vld [vmem:[#allocation8 + $0x4] sm:$0x1]
    %v214 = vsel %vm209, %v174, %v213
    %215 = vst [vmem:[#allocation8 + $0x4] sm:$0x1] %v214
    %v216 = vld [vmem:[#allocation8 + $0x8] sm:$0x1]
    %v217 = vsel %vm209, %v178, %v216
    %218 = vst [vmem:[#allocation8 + $0x8] sm:$0x1] %v217
    %v219 = vld [vmem:[#allocation8 + $0xc] sm:$0x1]
    %v220 = vsel %vm209, %v182, %v219
    %221 = vst [vmem:[#allocation8 + $0xc] sm:$0x1] %v220
    %v222 = vld [vmem:[#allocation8 + $0x10] sm:$0x1]
    %v223 = vsel %vm209, %v186, %v222
    %224 = vst [vmem:[#allocation8 + $0x10] sm:$0x1] %v223
    %v225 = vld [vmem:[#allocation8 + $0x14] sm:$0x1]
    %v226 = vsel %vm209, %v190, %v225
    %227 = vst [vmem:[#allocation8 + $0x14] sm:$0x1] %v226
    %v228 = vld [vmem:[#allocation8 + $0x18] sm:$0x1]
    %v229 = vsel %vm209, %v194, %v228
    %230 = vst [vmem:[#allocation8 + $0x18] sm:$0x1] %v229
    %v231 = vld [vmem:[#allocation8 + $0x1c] sm:$0x1]
    %v232 = vsel %vm209, %v198, %v231
    %233 = vst [vmem:[#allocation8 + $0x1c] sm:$0x1] %v232
    %s234 = scalar_lea.vmem [#allocation3], 8
    %v235 = vld [vmem:[%s234] sm:$0xff]
    %236 = vmatpush.bf16.msra.mxu0 %v107
    %237 = vmatpush.bf16.msra.mxu0 %v106
    %238 = vmatpush.bf16.msra.mxu0 %v105
    %239 = vmatpush.bf16.msra.mxu0 %v104
    %240 = vmatpush.bf16.msra.mxu0 %v103
    %241 = vmatpush.bf16.msra.mxu0 %v102
    %242 = vmatpush.bf16.msra.mxu0 %v101
    %243 = vmatpush.bf16.msra.mxu0 %v100
    %244 = vmatmul.bf16.gmra.mxu0 %v131
    %v245 = vpop.f32.mrf.mxu0
    %v246 = vadd.f32 0.0, %v245
    %v247 = vpop.f32.mrf.mxu0
    %248 = vdwg.mxu0
    %v249 = vadd.f32 %v235, %v246
    %v250 = vtanh.pop %v249
    %v251 = vpack.c.bf16 %v250, %v250
    %v253 = vrot.slane %v251, 3
    %v256 = vsel %vm134, %v251, %v253
    %v258 = vsel %vm139, %v251, %v253
    %v260 = vrot.slane %v258, 1
    %v261 = vsel %vm143, %v251, %v253
    %v263 = vrot.slane %v261, 2
    %v264 = vsel %vm147, %v251, %v253
    %v266 = vrot.slane %v264, 3
    %v267 = vunpack.i.l.s16 %v256
    %v268 = vunpack.i.h.s16 %v256
    %v269 = vunpack.i.l.s16 %v260
    %v270 = vunpack.i.h.s16 %v260
    %v271 = vunpack.i.l.s16 %v263
    %v272 = vunpack.i.h.s16 %v263
    %v273 = vunpack.i.l.s16 %v266
    %v274 = vunpack.i.h.s16 %v266
    %v275 = vpack.i.b16 %v267, %v267
    %v276 = vpack.i.b16 %v268, %v268
    %v277 = vpack.i.b16 %v269, %v269
    %v278 = vpack.i.b16 %v270, %v270
    %v279 = vpack.i.b16 %v271, %v271
    %v280 = vpack.i.b16 %v272, %v272
    %v281 = vpack.i.b16 %v273, %v273
    %v282 = vpack.i.b16 %v274, %v274
    %v284 = vunpack.c.l.s4 286326784
    %v285 = vunpack.c.0.s8 %v284
    %v286 = vperm.slane %v275, %v285
    %v288 = vunpack.c.l.s4 286326784
    %v289 = vunpack.c.0.s8 %v288
    %v290 = vperm.slane %v276, %v289
    %v292 = vunpack.c.l.s4 286326784
    %v293 = vunpack.c.0.s8 %v292
    %v294 = vperm.slane %v277, %v293
    %v296 = vunpack.c.l.s4 286326784
    %v297 = vunpack.c.0.s8 %v296
    %v298 = vperm.slane %v278, %v297
    %v300 = vunpack.c.l.s4 286326784
    %v301 = vunpack.c.0.s8 %v300
    %v302 = vperm.slane %v279, %v301
    %v304 = vunpack.c.l.s4 286326784
    %v305 = vunpack.c.0.s8 %v304
    %v306 = vperm.slane %v280, %v305
    %v308 = vunpack.c.l.s4 286326784
    %v309 = vunpack.c.0.s8 %v308
    %v310 = vperm.slane %v281, %v309
    %v312 = vunpack.c.l.s4 286326784
    %v313 = vunpack.c.0.s8 %v312
    %v314 = vperm.slane %v282, %v313
    %vm323 = vsmask.f32 7938
    %vm324 = vmand %vm207, %vm323
    %v325 = vld [vmem:[#allocation8] sm:$0x1]
    %v326 = vsel %vm324, %v286, %v325
    %327 = vst [vmem:[#allocation8] sm:$0x1] %v326
    %v328 = vld [vmem:[#allocation8 + $0x4] sm:$0x1]
    %v329 = vsel %vm324, %v290, %v328
    %330 = vst [vmem:[#allocation8 + $0x4] sm:$0x1] %v329
    %v331 = vld [vmem:[#allocation8 + $0x8] sm:$0x1]
    %v332 = vsel %vm324, %v294, %v331
    %333 = vst [vmem:[#allocation8 + $0x8] sm:$0x1] %v332
    %v334 = vld [vmem:[#allocation8 + $0xc] sm:$0x1]
    %v335 = vsel %vm324, %v298, %v334
    %336 = vst [vmem:[#allocation8 + $0xc] sm:$0x1] %v335
    %v337 = vld [vmem:[#allocation8 + $0x10] sm:$0x1]
    %v338 = vsel %vm324, %v302, %v337
    %339 = vst [vmem:[#allocation8 + $0x10] sm:$0x1] %v338
    %v340 = vld [vmem:[#allocation8 + $0x14] sm:$0x1]
    %v341 = vsel %vm324, %v306, %v340
    %342 = vst [vmem:[#allocation8 + $0x14] sm:$0x1] %v341
    %v343 = vld [vmem:[#allocation8 + $0x18] sm:$0x1]
    %v344 = vsel %vm324, %v310, %v343
    %345 = vst [vmem:[#allocation8 + $0x18] sm:$0x1] %v344
    %v346 = vld [vmem:[#allocation8 + $0x1c] sm:$0x1]
    %v347 = vsel %vm324, %v314, %v346
    %348 = vst [vmem:[#allocation8 + $0x1c] sm:$0x1] %v347
    %s349 = scalar_lea.vmem [#allocation3], 16
    %v350 = vld [vmem:[%s349] sm:$0xff]
    %351 = vmatpush.bf16.msra.mxu0 %v107
    %352 = vmatpush.bf16.msra.mxu0 %v106
    %353 = vmatpush.bf16.msra.mxu0 %v105
    %354 = vmatpush.bf16.msra.mxu0 %v104
    %355 = vmatpush.bf16.msra.mxu0 %v103
    %356 = vmatpush.bf16.msra.mxu0 %v102
    %357 = vmatpush.bf16.msra.mxu0 %v101
    %358 = vmatpush.bf16.msra.mxu0 %v100
    %359 = vmatmul.bf16.gmra.mxu0 %v251
    %v360 = vpop.f32.mrf.mxu0
    %v361 = vadd.f32 0.0, %v360
    %v362 = vpop.f32.mrf.mxu0
    %363 = vdwg.mxu0
    %v364 = vadd.f32 %v350, %v361
    %v365 = vtanh.pop %v364
    %v366 = vpack.c.bf16 %v365, %v365
    %v368 = vrot.slane %v366, 3
    %v371 = vsel %vm134, %v366, %v368
    %v373 = vsel %vm139, %v366, %v368
    %v375 = vrot.slane %v373, 1
    %v376 = vsel %vm143, %v366, %v368
    %v378 = vrot.slane %v376, 2
    %v379 = vsel %vm147, %v366, %v368
    %v381 = vrot.slane %v379, 3
    %v382 = vunpack.i.l.s16 %v371
    %v383 = vunpack.i.h.s16 %v371
    %v384 = vunpack.i.l.s16 %v375
    %v385 = vunpack.i.h.s16 %v375
    %v386 = vunpack.i.l.s16 %v378
    %v387 = vunpack.i.h.s16 %v378
    %v388 = vunpack.i.l.s16 %v381
    %v389 = vunpack.i.h.s16 %v381
    %v390 = vpack.i.b16 %v382, %v382
    %v391 = vpack.i.b16 %v383, %v383
    %v392 = vpack.i.b16 %v384, %v384
    %v393 = vpack.i.b16 %v385, %v385
    %v394 = vpack.i.b16 %v386, %v386
    %v395 = vpack.i.b16 %v387, %v387
    %v396 = vpack.i.b16 %v388, %v388
    %v397 = vpack.i.b16 %v389, %v389
    %v399 = vunpack.c.l.s4 286326784
    %v400 = vunpack.c.0.s8 %v399
    %v401 = vperm.slane %v390, %v400
    %v403 = vunpack.c.l.s4 286326784
    %v404 = vunpack.c.0.s8 %v403
    %v405 = vperm.slane %v391, %v404
    %v407 = vunpack.c.l.s4 286326784
    %v408 = vunpack.c.0.s8 %v407
    %v409 = vperm.slane %v392, %v408
    %v411 = vunpack.c.l.s4 286326784
    %v412 = vunpack.c.0.s8 %v411
    %v413 = vperm.slane %v393, %v412
    %v415 = vunpack.c.l.s4 286326784
    %v416 = vunpack.c.0.s8 %v415
    %v417 = vperm.slane %v394, %v416
    %v419 = vunpack.c.l.s4 286326784
    %v420 = vunpack.c.0.s8 %v419
    %v421 = vperm.slane %v395, %v420
    %v423 = vunpack.c.l.s4 286326784
    %v424 = vunpack.c.0.s8 %v423
    %v425 = vperm.slane %v396, %v424
    %v427 = vunpack.c.l.s4 286326784
    %v428 = vunpack.c.0.s8 %v427
    %v429 = vperm.slane %v397, %v428
    %vm438 = vcmask 1041409
    %vm439 = vsmask.f32 1280
    %vm440 = vmand %vm438, %vm439
    %v441 = vld [vmem:[#allocation8] sm:$0x2]
    %v442 = vsel %vm440, %v401, %v441
    %443 = vst [vmem:[#allocation8] sm:$0x2] %v442
    %v444 = vld [vmem:[#allocation8 + $0x4] sm:$0x2]
    %v445 = vsel %vm440, %v405, %v444
    %446 = vst [vmem:[#allocation8 + $0x4] sm:$0x2] %v445
    %v447 = vld [vmem:[#allocation8 + $0x8] sm:$0x2]
    %v448 = vsel %vm440, %v409, %v447
    %449 = vst [vmem:[#allocation8 + $0x8] sm:$0x2] %v448
    %v450 = vld [vmem:[#allocation8 + $0xc] sm:$0x2]
    %v451 = vsel %vm440, %v413, %v450
    %452 = vst [vmem:[#allocation8 + $0xc] sm:$0x2] %v451
    %v453 = vld [vmem:[#allocation8 + $0x10] sm:$0x2]
    %v454 = vsel %vm440, %v417, %v453
    %455 = vst [vmem:[#allocation8 + $0x10] sm:$0x2] %v454
    %v456 = vld [vmem:[#allocation8 + $0x14] sm:$0x2]
    %v457 = vsel %vm440, %v421, %v456
    %458 = vst [vmem:[#allocation8 + $0x14] sm:$0x2] %v457
    %v459 = vld [vmem:[#allocation8 + $0x18] sm:$0x2]
    %v460 = vsel %vm440, %v425, %v459
    %461 = vst [vmem:[#allocation8 + $0x18] sm:$0x2] %v460
    %v462 = vld [vmem:[#allocation8 + $0x1c] sm:$0x2]
    %v463 = vsel %vm440, %v429, %v462
    %464 = vst [vmem:[#allocation8 + $0x1c] sm:$0x2] %v463
    %s465 = scalar_lea.vmem [#allocation3], 24
    %v466 = vld [vmem:[%s465] sm:$0xff]
    %467 = vmatpush.bf16.msra.mxu0 %v107
    %468 = vmatpush.bf16.msra.mxu0 %v106
    %469 = vmatpush.bf16.msra.mxu0 %v105
    %470 = vmatpush.bf16.msra.mxu0 %v104
    %471 = vmatpush.bf16.msra.mxu0 %v103
    %472 = vmatpush.bf16.msra.mxu0 %v102
    %473 = vmatpush.bf16.msra.mxu0 %v101
    %474 = vmatpush.bf16.msra.mxu0 %v100
    %475 = vmatmul.bf16.gmra.mxu0 %v366
    %v476 = vpop.f32.mrf.mxu0
    %v477 = vadd.f32 0.0, %v476
    %v478 = vpop.f32.mrf.mxu0
    %479 = vdwg.mxu0
    %v480 = vadd.f32 %v466, %v477
    %v481 = vtanh.pop %v480
    %v482 = vpack.c.bf16 %v481, %v481
    %v484 = vrot.slane %v482, 3
    %v487 = vsel %vm134, %v482, %v484
    %v489 = vsel %vm139, %v482, %v484
    %v491 = vrot.slane %v489, 1
    %v492 = vsel %vm143, %v482, %v484
    %v494 = vrot.slane %v492, 2
    %v495 = vsel %vm147, %v482, %v484
    %v497 = vrot.slane %v495, 3
    %v498 = vunpack.i.l.s16 %v487
    %v499 = vunpack.i.h.s16 %v487
    %v500 = vunpack.i.l.s16 %v491
    %v501 = vunpack.i.h.s16 %v491
    %v502 = vunpack.i.l.s16 %v494
    %v503 = vunpack.i.h.s16 %v494
    %v504 = vunpack.i.l.s16 %v497
    %v505 = vunpack.i.h.s16 %v497
    %v506 = vpack.i.b16 %v498, %v498
    %v507 = vpack.i.b16 %v499, %v499
    %v508 = vpack.i.b16 %v500, %v500
    %v509 = vpack.i.b16 %v501, %v501
    %v510 = vpack.i.b16 %v502, %v502
    %v511 = vpack.i.b16 %v503, %v503
    %v512 = vpack.i.b16 %v504, %v504
    %v513 = vpack.i.b16 %v505, %v505
    %v515 = vunpack.c.l.s4 286326784
    %v516 = vunpack.c.0.s8 %v515
    %v517 = vperm.slane %v506, %v516
    %v519 = vunpack.c.l.s4 286326784
    %v520 = vunpack.c.0.s8 %v519
    %v521 = vperm.slane %v507, %v520
    %v523 = vunpack.c.l.s4 286326784
    %v524 = vunpack.c.0.s8 %v523
    %v525 = vperm.slane %v508, %v524
    %v527 = vunpack.c.l.s4 286326784
    %v528 = vunpack.c.0.s8 %v527
    %v529 = vperm.slane %v509, %v528
    %v531 = vunpack.c.l.s4 286326784
    %v532 = vunpack.c.0.s8 %v531
    %v533 = vperm.slane %v510, %v532
    %v535 = vunpack.c.l.s4 286326784
    %v536 = vunpack.c.0.s8 %v535
    %v537 = vperm.slane %v511, %v536
    %v539 = vunpack.c.l.s4 286326784
    %v540 = vunpack.c.0.s8 %v539
    %v541 = vperm.slane %v512, %v540
    %v543 = vunpack.c.l.s4 286326784
    %v544 = vunpack.c.0.s8 %v543
    %v545 = vperm.slane %v513, %v544
    %vm554 = vsmask.f32 7942
    %vm555 = vmand %vm438, %vm554
    %v556 = vld [vmem:[#allocation8] sm:$0x2]
    %v557 = vsel %vm555, %v517, %v556
    %558 = vst [vmem:[#allocation8] sm:$0x2] %v557
    %v559 = vld [vmem:[#allocation8 + $0x4] sm:$0x2]
    %v560 = vsel %vm555, %v521, %v559
    %561 = vst [vmem:[#allocation8 + $0x4] sm:$0x2] %v560
    %v562 = vld [vmem:[#allocation8 + $0x8] sm:$0x2]
    %v563 = vsel %vm555, %v525, %v562
    %564 = vst [vmem:[#allocation8 + $0x8] sm:$0x2] %v563
    %v565 = vld [vmem:[#allocation8 + $0xc] sm:$0x2]
    %v566 = vsel %vm555, %v529, %v565
    %567 = vst [vmem:[#allocation8 + $0xc] sm:$0x2] %v566
    %v568 = vld [vmem:[#allocation8 + $0x10] sm:$0x2]
    %v569 = vsel %vm555, %v533, %v568
    %570 = vst [vmem:[#allocation8 + $0x10] sm:$0x2] %v569
    %v571 = vld [vmem:[#allocation8 + $0x14] sm:$0x2]
    %v572 = vsel %vm555, %v537, %v571
    %573 = vst [vmem:[#allocation8 + $0x14] sm:$0x2] %v572
    %v574 = vld [vmem:[#allocation8 + $0x18] sm:$0x2]
    %v575 = vsel %vm555, %v541, %v574
    %576 = vst [vmem:[#allocation8 + $0x18] sm:$0x2] %v575
    %v577 = vld [vmem:[#allocation8 + $0x1c] sm:$0x2]
    %v578 = vsel %vm555, %v545, %v577
    %579 = vst [vmem:[#allocation8 + $0x1c] sm:$0x2] %v578
    %s580 = scalar_lea.vmem [#allocation3], 32
    %v581 = vld [vmem:[%s580] sm:$0xff]
    %582 = vmatpush.bf16.msra.mxu0 %v107
    %583 = vmatpush.bf16.msra.mxu0 %v106
    %584 = vmatpush.bf16.msra.mxu0 %v105
    %585 = vmatpush.bf16.msra.mxu0 %v104
    %586 = vmatpush.bf16.msra.mxu0 %v103
    %587 = vmatpush.bf16.msra.mxu0 %v102
    %588 = vmatpush.bf16.msra.mxu0 %v101
    %589 = vmatpush.bf16.msra.mxu0 %v100
    %590 = vmatmul.bf16.gmra.mxu0 %v482
    %v591 = vpop.f32.mrf.mxu0
    %v592 = vadd.f32 0.0, %v591
    %v593 = vpop.f32.mrf.mxu0
    %594 = vdwg.mxu0
    %v595 = vadd.f32 %v581, %v592
    %v596 = vtanh.pop %v595
    %v597 = vpack.c.bf16 %v596, %v596
    %v599 = vrot.slane %v597, 3
    %v602 = vsel %vm134, %v597, %v599
    %v604 = vsel %vm139, %v597, %v599
    %v606 = vrot.slane %v604, 1
    %v607 = vsel %vm143, %v597, %v599
    %v609 = vrot.slane %v607, 2
    %v610 = vsel %vm147, %v597, %v599
    %v612 = vrot.slane %v610, 3
    %v613 = vunpack.i.l.s16 %v602
    %v614 = vunpack.i.h.s16 %v602
    %v615 = vunpack.i.l.s16 %v606
    %v616 = vunpack.i.h.s16 %v606
    %v617 = vunpack.i.l.s16 %v609
    %v618 = vunpack.i.h.s16 %v609
    %v619 = vunpack.i.l.s16 %v612
    %v620 = vunpack.i.h.s16 %v612
    %v621 = vpack.i.b16 %v613, %v613
    %v622 = vpack.i.b16 %v614, %v614
    %v623 = vpack.i.b16 %v615, %v615
    %v624 = vpack.i.b16 %v616, %v616
    %v625 = vpack.i.b16 %v617, %v617
    %v626 = vpack.i.b16 %v618, %v618
    %v627 = vpack.i.b16 %v619, %v619
    %v628 = vpack.i.b16 %v620, %v620
    %v630 = vunpack.c.l.s4 286326784
    %v631 = vunpack.c.0.s8 %v630
    %v632 = vperm.slane %v621, %v631
    %v634 = vunpack.c.l.s4 286326784
    %v635 = vunpack.c.0.s8 %v634
    %v636 = vperm.slane %v622, %v635
    %v638 = vunpack.c.l.s4 286326784
    %v639 = vunpack.c.0.s8 %v638
    %v640 = vperm.slane %v623, %v639
    %v642 = vunpack.c.l.s4 286326784
    %v643 = vunpack.c.0.s8 %v642
    %v644 = vperm.slane %v624, %v643
    %v646 = vunpack.c.l.s4 286326784
    %v647 = vunpack.c.0.s8 %v646
    %v648 = vperm.slane %v625, %v647
    %v650 = vunpack.c.l.s4 286326784
    %v651 = vunpack.c.0.s8 %v650
    %v652 = vperm.slane %v626, %v651
    %v654 = vunpack.c.l.s4 286326784
    %v655 = vunpack.c.0.s8 %v654
    %v656 = vperm.slane %v627, %v655
    %v658 = vunpack.c.l.s4 286326784
    %v659 = vunpack.c.0.s8 %v658
    %v660 = vperm.slane %v628, %v659
    %vm669 = vcmask 1042434
    %vm670 = vsmask.f32 2304
    %vm671 = vmand %vm669, %vm670
    %v672 = vld [vmem:[#allocation8] sm:$0x4]
    %v673 = vsel %vm671, %v632, %v672
    %674 = vst [vmem:[#allocation8] sm:$0x4] %v673
    %v675 = vld [vmem:[#allocation8 + $0x4] sm:$0x4]
    %v676 = vsel %vm671, %v636, %v675
    %677 = vst [vmem:[#allocation8 + $0x4] sm:$0x4] %v676
    %v678 = vld [vmem:[#allocation8 + $0x8] sm:$0x4]
    %v679 = vsel %vm671, %v640, %v678
    %680 = vst [vmem:[#allocation8 + $0x8] sm:$0x4] %v679
    %v681 = vld [vmem:[#allocation8 + $0xc] sm:$0x4]
    %v682 = vsel %vm671, %v644, %v681
    %683 = vst [vmem:[#allocation8 + $0xc] sm:$0x4] %v682
    %v684 = vld [vmem:[#allocation8 + $0x10] sm:$0x4]
    %v685 = vsel %vm671, %v648, %v684
    %686 = vst [vmem:[#allocation8 + $0x10] sm:$0x4] %v685
    %v687 = vld [vmem:[#allocation8 + $0x14] sm:$0x4]
    %v688 = vsel %vm671, %v652, %v687
    %689 = vst [vmem:[#allocation8 + $0x14] sm:$0x4] %v688
    %v690 = vld [vmem:[#allocation8 + $0x18] sm:$0x4]
    %v691 = vsel %vm671, %v656, %v690
    %692 = vst [vmem:[#allocation8 + $0x18] sm:$0x4] %v691
    %v693 = vld [vmem:[#allocation8 + $0x1c] sm:$0x4]
    %v694 = vsel %vm671, %v660, %v693
    %695 = vst [vmem:[#allocation8 + $0x1c] sm:$0x4] %v694
    %s696 = scalar_lea.vmem [#allocation3], 40
    %v697 = vld [vmem:[%s696] sm:$0xff]
    %698 = vmatpush.bf16.msra.mxu0 %v107
    %699 = vmatpush.bf16.msra.mxu0 %v106
    %700 = vmatpush.bf16.msra.mxu0 %v105
    %701 = vmatpush.bf16.msra.mxu0 %v104
    %702 = vmatpush.bf16.msra.mxu0 %v103
    %703 = vmatpush.bf16.msra.mxu0 %v102
    %704 = vmatpush.bf16.msra.mxu0 %v101
    %705 = vmatpush.bf16.msra.mxu0 %v100
    %706 = vmatmul.bf16.gmra.mxu0 %v597
    %v707 = vpop.f32.mrf.mxu0
    %v708 = vadd.f32 0.0, %v707
    %v709 = vpop.f32.mrf.mxu0
    %710 = vdwg.mxu0
    %v711 = vadd.f32 %v697, %v708
    %v712 = vtanh.pop %v711
    %v713 = vpack.c.bf16 %v712, %v712
    %v715 = vrot.slane %v713, 3
    %v718 = vsel %vm134, %v713, %v715
    %v720 = vsel %vm139, %v713, %v715
    %v722 = vrot.slane %v720, 1
    %v723 = vsel %vm143, %v713, %v715
    %v725 = vrot.slane %v723, 2
    %v726 = vsel %vm147, %v713, %v715
    %v728 = vrot.slane %v726, 3
    %v729 = vunpack.i.l.s16 %v718
    %v730 = vunpack.i.h.s16 %v718
    %v731 = vunpack.i.l.s16 %v722
    %v732 = vunpack.i.h.s16 %v722
    %v733 = vunpack.i.l.s16 %v725
    %v734 = vunpack.i.h.s16 %v725
    %v735 = vunpack.i.l.s16 %v728
    %v736 = vunpack.i.h.s16 %v728
    %v737 = vpack.i.b16 %v729, %v729
    %v738 = vpack.i.b16 %v730, %v730
    %v739 = vpack.i.b16 %v731, %v731
    %v740 = vpack.i.b16 %v732, %v732
    %v741 = vpack.i.b16 %v733, %v733
    %v742 = vpack.i.b16 %v734, %v734
    %v743 = vpack.i.b16 %v735, %v735
    %v744 = vpack.i.b16 %v736, %v736
    %v746 = vunpack.c.l.s4 286326784
    %v747 = vunpack.c.0.s8 %v746
    %v748 = vperm.slane %v737, %v747
    %v750 = vunpack.c.l.s4 286326784
    %v751 = vunpack.c.0.s8 %v750
    %v752 = vperm.slane %v738, %v751
    %v754 = vunpack.c.l.s4 286326784
    %v755 = vunpack.c.0.s8 %v754
    %v756 = vperm.slane %v739, %v755
    %v758 = vunpack.c.l.s4 286326784
    %v759 = vunpack.c.0.s8 %v758
    %v760 = vperm.slane %v740, %v759
    %v762 = vunpack.c.l.s4 286326784
    %v763 = vunpack.c.0.s8 %v762
    %v764 = vperm.slane %v741, %v763
    %v766 = vunpack.c.l.s4 286326784
    %v767 = vunpack.c.0.s8 %v766
    %v768 = vperm.slane %v742, %v767
    %v770 = vunpack.c.l.s4 286326784
    %v771 = vunpack.c.0.s8 %v770
    %v772 = vperm.slane %v743, %v771
    %v774 = vunpack.c.l.s4 286326784
    %v775 = vunpack.c.0.s8 %v774
    %v776 = vperm.slane %v744, %v775
    %vm785 = vsmask.f32 7946
    %vm786 = vmand %vm669, %vm785
    %v787 = vld [vmem:[#allocation8] sm:$0x4]
    %v788 = vsel %vm786, %v748, %v787
    %789 = vst [vmem:[#allocation8] sm:$0x4] %v788
    %v790 = vld [vmem:[#allocation8 + $0x4] sm:$0x4]
    %v791 = vsel %vm786, %v752, %v790
    %792 = vst [vmem:[#allocation8 + $0x4] sm:$0x4] %v791
    %v793 = vld [vmem:[#allocation8 + $0x8] sm:$0x4]
    %v794 = vsel %vm786, %v756, %v793
    %795 = vst [vmem:[#allocation8 + $0x8] sm:$0x4] %v794
    %v796 = vld [vmem:[#allocation8 + $0xc] sm:$0x4]
    %v797 = vsel %vm786, %v760, %v796
    %798 = vst [vmem:[#allocation8 + $0xc] sm:$0x4] %v797
    %v799 = vld [vmem:[#allocation8 + $0x10] sm:$0x4]
    %v800 = vsel %vm786, %v764, %v799
    %801 = vst [vmem:[#allocation8 + $0x10] sm:$0x4] %v800
    %v802 = vld [vmem:[#allocation8 + $0x14] sm:$0x4]
    %v803 = vsel %vm786, %v768, %v802
    %804 = vst [vmem:[#allocation8 + $0x14] sm:$0x4] %v803
    %v805 = vld [vmem:[#allocation8 + $0x18] sm:$0x4]
    %v806 = vsel %vm786, %v772, %v805
    %807 = vst [vmem:[#allocation8 + $0x18] sm:$0x4] %v806
    %v808 = vld [vmem:[#allocation8 + $0x1c] sm:$0x4]
    %v809 = vsel %vm786, %v776, %v808
    %810 = vst [vmem:[#allocation8 + $0x1c] sm:$0x4] %v809
    %s811 = scalar_lea.vmem [#allocation3], 48
    %v812 = vld [vmem:[%s811] sm:$0xff]
    %813 = vmatpush.bf16.msra.mxu0 %v107
    %814 = vmatpush.bf16.msra.mxu0 %v106
    %815 = vmatpush.bf16.msra.mxu0 %v105
    %816 = vmatpush.bf16.msra.mxu0 %v104
    %817 = vmatpush.bf16.msra.mxu0 %v103
    %818 = vmatpush.bf16.msra.mxu0 %v102
    %819 = vmatpush.bf16.msra.mxu0 %v101
    %820 = vmatpush.bf16.msra.mxu0 %v100
    %821 = vmatmul.bf16.gmra.mxu0 %v713
    %v822 = vpop.f32.mrf.mxu0
    %v823 = vadd.f32 0.0, %v822
    %v824 = vpop.f32.mrf.mxu0
    %825 = vdwg.mxu0
    %v826 = vadd.f32 %v812, %v823
    %v827 = vtanh.pop %v826
    %v828 = vpack.c.bf16 %v827, %v827
    %v830 = vrot.slane %v828, 3
    %v833 = vsel %vm134, %v828, %v830
    %v835 = vsel %vm139, %v828, %v830
    %v837 = vrot.slane %v835, 1
    %v838 = vsel %vm143, %v828, %v830
    %v840 = vrot.slane %v838, 2
    %v841 = vsel %vm147, %v828, %v830
    %v843 = vrot.slane %v841, 3
    %v844 = vunpack.i.l.s16 %v833
    %v845 = vunpack.i.h.s16 %v833
    %v846 = vunpack.i.l.s16 %v837
    %v847 = vunpack.i.h.s16 %v837
    %v848 = vunpack.i.l.s16 %v840
    %v849 = vunpack.i.h.s16 %v840
    %v850 = vunpack.i.l.s16 %v843
    %v851 = vunpack.i.h.s16 %v843
    %v852 = vpack.i.b16 %v844, %v844
    %v853 = vpack.i.b16 %v845, %v845
    %v854 = vpack.i.b16 %v846, %v846
    %v855 = vpack.i.b16 %v847, %v847
    %v856 = vpack.i.b16 %v848, %v848
    %v857 = vpack.i.b16 %v849, %v849
    %v858 = vpack.i.b16 %v850, %v850
    %v859 = vpack.i.b16 %v851, %v851
    %v861 = vunpack.c.l.s4 286326784
    %v862 = vunpack.c.0.s8 %v861
    %v863 = vperm.slane %v852, %v862
    %v865 = vunpack.c.l.s4 286326784
    %v866 = vunpack.c.0.s8 %v865
    %v867 = vperm.slane %v853, %v866
    %v869 = vunpack.c.l.s4 286326784
    %v870 = vunpack.c.0.s8 %v869
    %v871 = vperm.slane %v854, %v870
    %v873 = vunpack.c.l.s4 286326784
    %v874 = vunpack.c.0.s8 %v873
    %v875 = vperm.slane %v855, %v874
    %v877 = vunpack.c.l.s4 286326784
    %v878 = vunpack.c.0.s8 %v877
    %v879 = vperm.slane %v856, %v878
    %v881 = vunpack.c.l.s4 286326784
    %v882 = vunpack.c.0.s8 %v881
    %v883 = vperm.slane %v857, %v882
    %v885 = vunpack.c.l.s4 286326784
    %v886 = vunpack.c.0.s8 %v885
    %v887 = vperm.slane %v858, %v886
    %v889 = vunpack.c.l.s4 286326784
    %v890 = vunpack.c.0.s8 %v889
    %v891 = vperm.slane %v859, %v890
    %vm900 = vcmask 1043459
    %vm901 = vsmask.f32 3328
    %vm902 = vmand %vm900, %vm901
    %v903 = vld [vmem:[#allocation8] sm:$0x8]
    %v904 = vsel %vm902, %v863, %v903
    %905 = vst [vmem:[#allocation8] sm:$0x8] %v904
    %v906 = vld [vmem:[#allocation8 + $0x4] sm:$0x8]
    %v907 = vsel %vm902, %v867, %v906
    %908 = vst [vmem:[#allocation8 + $0x4] sm:$0x8] %v907
    %v909 = vld [vmem:[#allocation8 + $0x8] sm:$0x8]
    %v910 = vsel %vm902, %v871, %v909
    %911 = vst [vmem:[#allocation8 + $0x8] sm:$0x8] %v910
    %v912 = vld [vmem:[#allocation8 + $0xc] sm:$0x8]
    %v913 = vsel %vm902, %v875, %v912
    %914 = vst [vmem:[#allocation8 + $0xc] sm:$0x8] %v913
    %v915 = vld [vmem:[#allocation8 + $0x10] sm:$0x8]
    %v916 = vsel %vm902, %v879, %v915
    %917 = vst [vmem:[#allocation8 + $0x10] sm:$0x8] %v916
    %v918 = vld [vmem:[#allocation8 + $0x14] sm:$0x8]
    %v919 = vsel %vm902, %v883, %v918
    %920 = vst [vmem:[#allocation8 + $0x14] sm:$0x8] %v919
    %v921 = vld [vmem:[#allocation8 + $0x18] sm:$0x8]
    %v922 = vsel %vm902, %v887, %v921
    %923 = vst [vmem:[#allocation8 + $0x18] sm:$0x8] %v922
    %v924 = vld [vmem:[#allocation8 + $0x1c] sm:$0x8]
    %v925 = vsel %vm902, %v891, %v924
    %926 = vst [vmem:[#allocation8 + $0x1c] sm:$0x8] %v925
    %s927 = scalar_lea.vmem [#allocation3], 56
    %v928 = vld [vmem:[%s927] sm:$0xff]
    %929 = vmatpush.bf16.msra.mxu0 %v107
    %930 = vmatpush.bf16.msra.mxu0 %v106
    %931 = vmatpush.bf16.msra.mxu0 %v105
    %932 = vmatpush.bf16.msra.mxu0 %v104
    %933 = vmatpush.bf16.msra.mxu0 %v103
    %934 = vmatpush.bf16.msra.mxu0 %v102
    %935 = vmatpush.bf16.msra.mxu0 %v101
    %936 = vmatpush.bf16.msra.mxu0 %v100
    %937 = vmatmul.bf16.gmra.mxu0 %v828
    %v938 = vpop.f32.mrf.mxu0
    %v939 = vadd.f32 0.0, %v938
    %v940 = vpop.f32.mrf.mxu0
    %941 = vdwg.mxu0
    %v942 = vadd.f32 %v928, %v939
    %v943 = vtanh.pop %v942
    %v944 = vpack.c.bf16 %v943, %v943
    %v946 = vrot.slane %v944, 3
    %v949 = vsel %vm134, %v944, %v946
    %v951 = vsel %vm139, %v944, %v946
    %v953 = vrot.slane %v951, 1
    %v954 = vsel %vm143, %v944, %v946
    %v956 = vrot.slane %v954, 2
    %v957 = vsel %vm147, %v944, %v946
    %v959 = vrot.slane %v957, 3
    %v960 = vunpack.i.l.s16 %v949
    %v961 = vunpack.i.h.s16 %v949
    %v962 = vunpack.i.l.s16 %v953
    %v963 = vunpack.i.h.s16 %v953
    %v964 = vunpack.i.l.s16 %v956
    %v965 = vunpack.i.h.s16 %v956
    %v966 = vunpack.i.l.s16 %v959
    %v967 = vunpack.i.h.s16 %v959
    %v968 = vpack.i.b16 %v960, %v960
    %v969 = vpack.i.b16 %v961, %v961
    %v970 = vpack.i.b16 %v962, %v962
    %v971 = vpack.i.b16 %v963, %v963
    %v972 = vpack.i.b16 %v964, %v964
    %v973 = vpack.i.b16 %v965, %v965
    %v974 = vpack.i.b16 %v966, %v966
    %v975 = vpack.i.b16 %v967, %v967
    %v977 = vunpack.c.l.s4 286326784
    %v978 = vunpack.c.0.s8 %v977
    %v979 = vperm.slane %v968, %v978
    %v981 = vunpack.c.l.s4 286326784
    %v982 = vunpack.c.0.s8 %v981
    %v983 = vperm.slane %v969, %v982
    %v985 = vunpack.c.l.s4 286326784
    %v986 = vunpack.c.0.s8 %v985
    %v987 = vperm.slane %v970, %v986
    %v989 = vunpack.c.l.s4 286326784
    %v990 = vunpack.c.0.s8 %v989
    %v991 = vperm.slane %v971, %v990
    %v993 = vunpack.c.l.s4 286326784
    %v994 = vunpack.c.0.s8 %v993
    %v995 = vperm.slane %v972, %v994
    %v997 = vunpack.c.l.s4 286326784
    %v998 = vunpack.c.0.s8 %v997
    %v999 = vperm.slane %v973, %v998
    %v1001 = vunpack.c.l.s4 286326784
    %v1002 = vunpack.c.0.s8 %v1001
    %v1003 = vperm.slane %v974, %v1002
    %v1005 = vunpack.c.l.s4 286326784
    %v1006 = vunpack.c.0.s8 %v1005
    %v1007 = vperm.slane %v975, %v1006
    %vm1016 = vsmask.f32 7950
    %vm1017 = vmand %vm900, %vm1016
    %v1018 = vld [vmem:[#allocation8] sm:$0x8]
    %v1019 = vsel %vm1017, %v979, %v1018
    %1020 = vst [vmem:[#allocation8] sm:$0x8] %v1019
    %v1021 = vld [vmem:[#allocation8 + $0x4] sm:$0x8]
    %v1022 = vsel %vm1017, %v983, %v1021
    %1023 = vst [vmem:[#allocation8 + $0x4] sm:$0x8] %v1022
    %v1024 = vld [vmem:[#allocation8 + $0x8] sm:$0x8]
    %v1025 = vsel %vm1017, %v987, %v1024
    %1026 = vst [vmem:[#allocation8 + $0x8] sm:$0x8] %v1025
    %v1027 = vld [vmem:[#allocation8 + $0xc] sm:$0x8]
    %v1028 = vsel %vm1017, %v991, %v1027
    %1029 = vst [vmem:[#allocation8 + $0xc] sm:$0x8] %v1028
    %v1030 = vld [vmem:[#allocation8 + $0x10] sm:$0x8]
    %v1031 = vsel %vm1017, %v995, %v1030
    %1032 = vst [vmem:[#allocation8 + $0x10] sm:$0x8] %v1031
    %v1033 = vld [vmem:[#allocation8 + $0x14] sm:$0x8]
    %v1034 = vsel %vm1017, %v999, %v1033
    %1035 = vst [vmem:[#allocation8 + $0x14] sm:$0x8] %v1034
    %v1036 = vld [vmem:[#allocation8 + $0x18] sm:$0x8]
    %v1037 = vsel %vm1017, %v1003, %v1036
    %1038 = vst [vmem:[#allocation8 + $0x18] sm:$0x8] %v1037
    %v1039 = vld [vmem:[#allocation8 + $0x1c] sm:$0x8]
    %v1040 = vsel %vm1017, %v1007, %v1039
    %1041 = vst [vmem:[#allocation8 + $0x1c] sm:$0x8] %v1040
    %1042 = vst [vmem:[#allocation2] sm:$0xff] %v943
    // Predicated region
    $region22: #{tpu_custom_call.1} parent=1 // pred_check
      _
    $region23: #{tpu_custom_call.1} parent=1 // pred_check_branch
      %1044 = sbr.rel (0) target = $region25
    $region24: #{tpu_custom_call.1} parent=1 // pred_region
      %1046 = vsyncadd [#allocation5], 0
      %s1047 = sshll.u32 [#allocation8], 4
      %s1048 = int_to_ptr.vmem [resolvable:$true] %s1047
      %s1049 = sshll.u32 %s2, 4
      %s1050 = int_to_ptr.hbm [resolvable:$true] %s1049
      %1055 = dma.vmem_to_hbm [thread:$0]  %s1048, 512, %s1050, [#allocation5], 64, 64, 4
    $region25: #{tpu_custom_call.1} parent=1 // pred_fallthru
      _
    // Predicated region
    $region26: #{tpu_custom_call.1} parent=1 // pred_check
      _
    $region27: #{tpu_custom_call.1} parent=1 // pred_check_branch
      %1057 = sbr.rel (0) target = $region29
    $region28: #{tpu_custom_call.1} parent=1 // pred_region
      %1059 = dma.done [#allocation5], 512
    $region29: #{tpu_custom_call.1} parent=1 // pred_fallthru
      _
    %1060 = vsyncpa [#allocation4], 1
    %1061 = vsyncpa [#allocation7], 1
    %1062 = vsyncpa [#allocation5], 1

</llo_original>
